<compile_context>
chip_gen: v5e
topology: v5e:2x2
jax: 0.10.0
libtpu: 0.0.40
codegen_flags: <defaults>
</compile_context>

<pallas_src>
import functools
import itertools

import jax
import jax.numpy as jnp
from jax import lax
from jax.experimental import pallas as pl
from jax.experimental.pallas import tpu as pltpu

SAMPLES = 4                                   # samples_count in the PyTorch module
CHANNELS = 3 * SAMPLES                        # positives / flipped / negatives = 12
_POS_PAIRS = tuple(itertools.combinations(range(SAMPLES), 2))   # 6 pairs
_NUM_OBJ_BLOCKS = len(_POS_PAIRS) + SAMPLES                     # 6 + 4 = 10
_NUM_REG_BLOCKS = SAMPLES * SAMPLES                             # 16
_OUT_LANES = 128                              # lane-dense per-tile partial output
_TARGET_BLOCK_BYTES = 8 << 20                 # ~8 MiB per (double-buffered) input block


def _curvature_loss_kernel(x_ref, o_ref, *, batch, tile_b, chunk_b, dim,
                           compute_dtype, needs_mask, unroll):
    """One grid step: rows [i*tile_b, (i+1)*tile_b) of the channel-major input.

    x_ref: (CHANNELS, tile_b, dim) block of the (12, B, D) array.
    o_ref: (1, _OUT_LANES) f32 -- per-tile partial sum of
           (objective_row + regularization_row), broadcast over lanes.
    """
    i = pl.program_id(0)
    n_chunks = tile_b // chunk_b

    def load(channel, r0):
        # Channel-major layout: this is a contiguous (chunk_b, dim) slab of the
        # VMEM block -- rows on sublanes, D on lanes, no relayout/gather.
        return x_ref[channel, pl.ds(r0, chunk_b), :].astype(compute_dtype)

    def chunk_terms(r0, carry):
        acc_obj, acc_reg = carry
        pos = [load(s, r0) for s in range(SAMPLES)]          # live across all terms

        # objective: 6 x |p_i - p_j| + 4 x |p_i + pf_i|, accumulated
        # elementwise in f32 (no per-term lane reduction).
        obj = jnp.zeros((chunk_b, dim), jnp.float32)
        for a, b in _POS_PAIRS:
            obj = obj + jnp.abs(pos[a] - pos[b]).astype(jnp.float32)
        for s in range(SAMPLES):
            obj = obj + jnp.abs(pos[s] + load(SAMPLES + s, r0)).astype(jnp.float32)

        # regularization: 16 x exp(-|p_i - n_j|), accumulated elementwise.
        # exp stays in compute_dtype (bf16 for bf16 inputs), accumulation is f32.
        reg = jnp.zeros((chunk_b, dim), jnp.float32)
        for b in range(SAMPLES):
            nb = load(2 * SAMPLES + b, r0)
            for a in range(SAMPLES):
                reg = reg + jnp.exp(-jnp.abs(pos[a] - nb)).astype(jnp.float32)

        if needs_mask:
            # Rows past the true batch size are Pallas boundary padding
            # (undefined data).  They flow through abs/exp above, which is safe
            # because jnp.where (a select) discards NaN/Inf from the dead
            # branch; do NOT replace this select with a multiply-by-mask.
            row = (i * tile_b + r0
                   + lax.broadcasted_iota(jnp.int32, (chunk_b, 1), 0))
            valid = row < batch
            obj = jnp.where(valid, obj, 0.0)
            reg = jnp.where(valid, reg, 0.0)

        return acc_obj + obj, acc_reg + reg

    init = (jnp.zeros((chunk_b, dim), jnp.float32),
            jnp.zeros((chunk_b, dim), jnp.float32))
    if n_chunks == 1:
        acc_obj, acc_reg = chunk_terms(0, init)
    else:
        def fori_body(c, carry):
            r0 = pl.multiple_of(c * chunk_b, chunk_b)
            return chunk_terms(r0, carry)
        acc_obj, acc_reg = lax.fori_loop(0, n_chunks, fori_body, init,
                                         unroll=unroll)

    # The only tree-reduces of this grid step: (chunk_b, dim) -> (1, 1).
    inv_obj = 1.0 / (_NUM_OBJ_BLOCKS * dim)
    inv_reg = 1.0 / (_NUM_REG_BLOCKS * dim)
    partial = (jnp.sum(acc_obj, keepdims=True) * inv_obj
               + jnp.sum(acc_reg, keepdims=True) * inv_reg)          # (1, 1)
    o_ref[...] = jnp.broadcast_to(partial, (1, _OUT_LANES)).astype(jnp.float32)


def _tile_sizes(batch, dim, itemsize):
    """Pick (tile_b, chunk_b): chunk keeps the live vreg set small, tile
    targets ~_TARGET_BLOCK_BYTES of VMEM per input block."""
    dpad = ((dim + 127) // 128) * 128             # lane-padded slab width in VMEM
    # rows per inner chunk: one (chunk, dpad) f32 channel slab ~= 4 vregs
    chunk = max(8, min(64, ((4096 // dpad) // 8) * 8))
    if batch <= chunk:
        return batch, batch                        # single small tile, no masking
    tile = (_TARGET_BLOCK_BYTES // (CHANNELS * dpad * itemsize)) // chunk * chunk
    tile = max(chunk, min(tile, (batch // chunk) * chunk))
    return tile, chunk


def curvature_loss(output: jax.Array, batch_data=None) -> jax.Array:
    """Pallas implementation of CurvatureLoss.forward.  Returns an f32 scalar."""
    del batch_data                                 # unused, same as the PyTorch module
    batch, channels, dim = output.shape
    if channels < CHANNELS:
        raise ValueError(f"need at least {CHANNELS} channels, got {channels}")
    x = output if channels == CHANNELS else output[:, :CHANNELS, :]

    # Channel-major layout (12, B, D): every channel lands as a clean (rows, D)
    # slab with rows on sublanes and D on lanes, so the kernel never does a
    # sublane gather per channel.  (A producer could emit this layout directly.)
    x = jnp.transpose(x, (1, 0, 2))

    compute_dtype = jnp.bfloat16 if x.dtype == jnp.bfloat16 else jnp.float32
    itemsize = jnp.dtype(x.dtype).itemsize
    tile_b, chunk_b = _tile_sizes(batch, dim, itemsize)
    num_tiles = pl.cdiv(batch, tile_b)
    n_chunks = tile_b // chunk_b
    needs_mask = (batch % tile_b) != 0
    unroll = True if n_chunks <= 8 else 2

    kernel = functools.partial(
        _curvature_loss_kernel,
        batch=batch, tile_b=tile_b, chunk_b=chunk_b, dim=dim,
        compute_dtype=compute_dtype, needs_mask=needs_mask, unroll=unroll)

    cost = pl.CostEstimate(
        flops=80 * batch * dim,
        transcendentals=_NUM_REG_BLOCKS * batch * dim,
        bytes_accessed=batch * CHANNELS * dim * itemsize
                       + num_tiles * _OUT_LANES * 4)

    partials = pl.pallas_call(
        kernel,
        out_shape=jax.ShapeDtypeStruct((num_tiles, _OUT_LANES), jnp.float32),
        grid_spec=pltpu.PrefetchScalarGridSpec(
            num_scalar_prefetch=0,
            grid=(num_tiles,),
            in_specs=[pl.BlockSpec((CHANNELS, tile_b, dim), lambda i: (0, i, 0))],
            out_specs=pl.BlockSpec((1, _OUT_LANES), lambda i: (i, 0)),
        ),
        compiler_params=pltpu.CompilerParams(
            dimension_semantics=("parallel",),      # per-tile partials -> 2 TCs on v7x
            vmem_limit_bytes=32 * 1024 * 1024,
        ),
        cost_estimate=cost,
    )(x)

    # Tiny final reduction over the per-tile f32 partials, then the batch mean.
    return jnp.sum(partials[:, 0]) / batch


class CurvatureLoss:
    """Mirror of the PyTorch module interface."""

    def __call__(self, output, batch_data=None):
        return curvature_loss(output, batch_data)

    forward = __call__


def _reference(output):
    """Pure-JAX replica of the PyTorch forward pass (for verification)."""
    pos = [output[:, s, :] for s in range(SAMPLES)]
    pos_f = [output[:, SAMPLES + s, :] for s in range(SAMPLES)]
    neg = [output[:, 2 * SAMPLES + s, :] for s in range(SAMPLES)]
    positive_diffs = [jnp.abs(pos[a] - pos[b]) for a, b in _POS_PAIRS]
    positive_diffs += [jnp.abs(pos[s] + pos_f[s]) for s in range(SAMPLES)]
    objective = jnp.concatenate(positive_diffs, axis=1).mean(axis=1)
    negative_diffs = [-jnp.abs(pos[a] - neg[b])
                      for a in range(SAMPLES) for b in range(SAMPLES)]
    regularization = jnp.exp(jnp.concatenate(negative_diffs, axis=1)).mean(axis=1)
    return (objective + regularization).mean(axis=0)


if __name__ == "__main__":
    key = jax.random.PRNGKey(0)
    k1, k2, k3, k4 = jax.random.split(key, 4)

    # Shape implied by the module: [batch, 3 * samples_count, descriptor_dim].
    x = jax.random.normal(k1, (2, 12, 32), dtype=jnp.float32)
    loss_mod = CurvatureLoss()
    result = jax.block_until_ready(loss_mod(x, None))
    expected = _reference(x)
    assert result.shape == (), result.shape
    assert jnp.allclose(result, expected, rtol=1e-5, atol=1e-6), (result, expected)

    # Multi-tile with a partial last tile (exercises the row mask and the
    # parallel per-tile partial outputs).
    x2 = jax.random.normal(k2, (37, 12, 32), dtype=jnp.float32)
    r2 = jax.block_until_ready(curvature_loss(x2))
    e2 = _reference(x2)
    assert jnp.allclose(r2, e2, rtol=1e-5, atol=1e-6), (r2, e2)

    # Larger descriptor dim (exercises the row-chunked inner fori_loop).
    x3 = jax.random.normal(k3, (40, 12, 256), dtype=jnp.float32)
    r3 = jax.block_until_ready(curvature_loss(x3))
    e3 = _reference(x3)
    assert jnp.allclose(r3, e3, rtol=1e-5, atol=1e-6), (r3, e3)

    # Larger batch (exercises multi-chunk tiles with partial unrolling + mask).
    x4 = jax.random.normal(k4, (300, 12, 32), dtype=jnp.float32)
    r4 = jax.block_until_ready(curvature_loss(x4))
    e4 = _reference(x4)
    assert jnp.allclose(r4, e4, rtol=1e-5, atol=1e-6), (r4, e4)

    print("KERNEL_OK")
</pallas_src>

<mosaic_0001>
module attributes {stable_mosaic.version = 11 : i64} {
  func.func @_curvature_loss_kernel(%arg0: i32, %arg1: memref<12x2x32xf32, #tpu.memory_space<vmem>>, %arg2: memref<1x128xf32, #tpu.memory_space<vmem>>) attributes {dimension_semantics = [#tpu.dimension_semantics<parallel>], iteration_bounds = array<i64: 1>, scalar_prefetch = 0 : i64, scratch_operands = 0 : i64, tpu.core_type = #tpu.core_type<tc>, window_params = [{transform_indices = @transform_0, window_bounds = array<i64: 12, 2, 32>}, {transform_indices = @transform_1, window_bounds = array<i64: 1, 128>}]} {
    %cst = arith.constant 0.000000e+00 : f32
    %0 = vector.broadcast %cst : f32 to vector<2x32xf32>
    %cst_0 = arith.constant 0.000000e+00 : f32
    %1 = vector.broadcast %cst_0 : f32 to vector<2x32xf32>
    %c0 = arith.constant 0 : index
    %c0_1 = arith.constant 0 : index
    %c0_2 = arith.constant 0 : index
    %2 = vector.load %arg1[%c0, %c0_1, %c0_2] : memref<12x2x32xf32, #tpu.memory_space<vmem>>, vector<1x2x32xf32>
    %3 = vector.shape_cast %2 : vector<1x2x32xf32> to vector<2x32xf32>
    %c1 = arith.constant 1 : index
    %c0_3 = arith.constant 0 : index
    %c0_4 = arith.constant 0 : index
    %4 = vector.load %arg1[%c1, %c0_3, %c0_4] : memref<12x2x32xf32, #tpu.memory_space<vmem>>, vector<1x2x32xf32>
    %5 = vector.shape_cast %4 : vector<1x2x32xf32> to vector<2x32xf32>
    %c2 = arith.constant 2 : index
    %c0_5 = arith.constant 0 : index
    %c0_6 = arith.constant 0 : index
    %6 = vector.load %arg1[%c2, %c0_5, %c0_6] : memref<12x2x32xf32, #tpu.memory_space<vmem>>, vector<1x2x32xf32>
    %7 = vector.shape_cast %6 : vector<1x2x32xf32> to vector<2x32xf32>
    %c3 = arith.constant 3 : index
    %c0_7 = arith.constant 0 : index
    %c0_8 = arith.constant 0 : index
    %8 = vector.load %arg1[%c3, %c0_7, %c0_8] : memref<12x2x32xf32, #tpu.memory_space<vmem>>, vector<1x2x32xf32>
    %9 = vector.shape_cast %8 : vector<1x2x32xf32> to vector<2x32xf32>
    %cst_9 = arith.constant 0.000000e+00 : f32
    %10 = vector.broadcast %cst_9 : f32 to vector<2x32xf32>
    %11 = arith.subf %3, %5 : vector<2x32xf32>
    %12 = math.absf %11 : vector<2x32xf32>
    %13 = arith.addf %10, %12 : vector<2x32xf32>
    %14 = arith.subf %3, %7 : vector<2x32xf32>
    %15 = math.absf %14 : vector<2x32xf32>
    %16 = arith.addf %13, %15 : vector<2x32xf32>
    %17 = arith.subf %3, %9 : vector<2x32xf32>
    %18 = math.absf %17 : vector<2x32xf32>
    %19 = arith.addf %16, %18 : vector<2x32xf32>
    %20 = arith.subf %5, %7 : vector<2x32xf32>
    %21 = math.absf %20 : vector<2x32xf32>
    %22 = arith.addf %19, %21 : vector<2x32xf32>
    %23 = arith.subf %5, %9 : vector<2x32xf32>
    %24 = math.absf %23 : vector<2x32xf32>
    %25 = arith.addf %22, %24 : vector<2x32xf32>
    %26 = arith.subf %7, %9 : vector<2x32xf32>
    %27 = math.absf %26 : vector<2x32xf32>
    %28 = arith.addf %25, %27 : vector<2x32xf32>
    %c4 = arith.constant 4 : index
    %c0_10 = arith.constant 0 : index
    %c0_11 = arith.constant 0 : index
    %29 = vector.load %arg1[%c4, %c0_10, %c0_11] : memref<12x2x32xf32, #tpu.memory_space<vmem>>, vector<1x2x32xf32>
    %30 = vector.shape_cast %29 : vector<1x2x32xf32> to vector<2x32xf32>
    %31 = arith.addf %3, %30 : vector<2x32xf32>
    %32 = math.absf %31 : vector<2x32xf32>
    %33 = arith.addf %28, %32 : vector<2x32xf32>
    %c5 = arith.constant 5 : index
    %c0_12 = arith.constant 0 : index
    %c0_13 = arith.constant 0 : index
    %34 = vector.load %arg1[%c5, %c0_12, %c0_13] : memref<12x2x32xf32, #tpu.memory_space<vmem>>, vector<1x2x32xf32>
    %35 = vector.shape_cast %34 : vector<1x2x32xf32> to vector<2x32xf32>
    %36 = arith.addf %5, %35 : vector<2x32xf32>
    %37 = math.absf %36 : vector<2x32xf32>
    %38 = arith.addf %33, %37 : vector<2x32xf32>
    %c6 = arith.constant 6 : index
    %c0_14 = arith.constant 0 : index
    %c0_15 = arith.constant 0 : index
    %39 = vector.load %arg1[%c6, %c0_14, %c0_15] : memref<12x2x32xf32, #tpu.memory_space<vmem>>, vector<1x2x32xf32>
    %40 = vector.shape_cast %39 : vector<1x2x32xf32> to vector<2x32xf32>
    %41 = arith.addf %7, %40 : vector<2x32xf32>
    %42 = math.absf %41 : vector<2x32xf32>
    %43 = arith.addf %38, %42 : vector<2x32xf32>
    %c7 = arith.constant 7 : index
    %c0_16 = arith.constant 0 : index
    %c0_17 = arith.constant 0 : index
    %44 = vector.load %arg1[%c7, %c0_16, %c0_17] : memref<12x2x32xf32, #tpu.memory_space<vmem>>, vector<1x2x32xf32>
    %45 = vector.shape_cast %44 : vector<1x2x32xf32> to vector<2x32xf32>
    %46 = arith.addf %9, %45 : vector<2x32xf32>
    %47 = math.absf %46 : vector<2x32xf32>
    %48 = arith.addf %43, %47 : vector<2x32xf32>
    %cst_18 = arith.constant 0.000000e+00 : f32
    %49 = vector.broadcast %cst_18 : f32 to vector<2x32xf32>
    %c8 = arith.constant 8 : index
    %c0_19 = arith.constant 0 : index
    %c0_20 = arith.constant 0 : index
    %50 = vector.load %arg1[%c8, %c0_19, %c0_20] : memref<12x2x32xf32, #tpu.memory_space<vmem>>, vector<1x2x32xf32>
    %51 = vector.shape_cast %50 : vector<1x2x32xf32> to vector<2x32xf32>
    %52 = arith.subf %3, %51 : vector<2x32xf32>
    %53 = math.absf %52 : vector<2x32xf32>
    %cst_21 = arith.constant 0.000000e+00 : f32
    %54 = vector.broadcast %cst_21 : f32 to vector<2x32xf32>
    %55 = arith.subf %54, %53 : vector<2x32xf32>
    %56 = math.exp %55 : vector<2x32xf32>
    %57 = arith.addf %49, %56 : vector<2x32xf32>
    %58 = arith.subf %5, %51 : vector<2x32xf32>
    %59 = math.absf %58 : vector<2x32xf32>
    %cst_22 = arith.constant 0.000000e+00 : f32
    %60 = vector.broadcast %cst_22 : f32 to vector<2x32xf32>
    %61 = arith.subf %60, %59 : vector<2x32xf32>
    %62 = math.exp %61 : vector<2x32xf32>
    %63 = arith.addf %57, %62 : vector<2x32xf32>
    %64 = arith.subf %7, %51 : vector<2x32xf32>
    %65 = math.absf %64 : vector<2x32xf32>
    %cst_23 = arith.constant 0.000000e+00 : f32
    %66 = vector.broadcast %cst_23 : f32 to vector<2x32xf32>
    %67 = arith.subf %66, %65 : vector<2x32xf32>
    %68 = math.exp %67 : vector<2x32xf32>
    %69 = arith.addf %63, %68 : vector<2x32xf32>
    %70 = arith.subf %9, %51 : vector<2x32xf32>
    %71 = math.absf %70 : vector<2x32xf32>
    %cst_24 = arith.constant 0.000000e+00 : f32
    %72 = vector.broadcast %cst_24 : f32 to vector<2x32xf32>
    %73 = arith.subf %72, %71 : vector<2x32xf32>
    %74 = math.exp %73 : vector<2x32xf32>
    %75 = arith.addf %69, %74 : vector<2x32xf32>
    %c9 = arith.constant 9 : index
    %c0_25 = arith.constant 0 : index
    %c0_26 = arith.constant 0 : index
    %76 = vector.load %arg1[%c9, %c0_25, %c0_26] : memref<12x2x32xf32, #tpu.memory_space<vmem>>, vector<1x2x32xf32>
    %77 = vector.shape_cast %76 : vector<1x2x32xf32> to vector<2x32xf32>
    %78 = arith.subf %3, %77 : vector<2x32xf32>
    %79 = math.absf %78 : vector<2x32xf32>
    %cst_27 = arith.constant 0.000000e+00 : f32
    %80 = vector.broadcast %cst_27 : f32 to vector<2x32xf32>
    %81 = arith.subf %80, %79 : vector<2x32xf32>
    %82 = math.exp %81 : vector<2x32xf32>
    %83 = arith.addf %75, %82 : vector<2x32xf32>
    %84 = arith.subf %5, %77 : vector<2x32xf32>
    %85 = math.absf %84 : vector<2x32xf32>
    %cst_28 = arith.constant 0.000000e+00 : f32
    %86 = vector.broadcast %cst_28 : f32 to vector<2x32xf32>
    %87 = arith.subf %86, %85 : vector<2x32xf32>
    %88 = math.exp %87 : vector<2x32xf32>
    %89 = arith.addf %83, %88 : vector<2x32xf32>
    %90 = arith.subf %7, %77 : vector<2x32xf32>
    %91 = math.absf %90 : vector<2x32xf32>
    %cst_29 = arith.constant 0.000000e+00 : f32
    %92 = vector.broadcast %cst_29 : f32 to vector<2x32xf32>
    %93 = arith.subf %92, %91 : vector<2x32xf32>
    %94 = math.exp %93 : vector<2x32xf32>
    %95 = arith.addf %89, %94 : vector<2x32xf32>
    %96 = arith.subf %9, %77 : vector<2x32xf32>
    %97 = math.absf %96 : vector<2x32xf32>
    %cst_30 = arith.constant 0.000000e+00 : f32
    %98 = vector.broadcast %cst_30 : f32 to vector<2x32xf32>
    %99 = arith.subf %98, %97 : vector<2x32xf32>
    %100 = math.exp %99 : vector<2x32xf32>
    %101 = arith.addf %95, %100 : vector<2x32xf32>
    %c10 = arith.constant 10 : index
    %c0_31 = arith.constant 0 : index
    %c0_32 = arith.constant 0 : index
    %102 = vector.load %arg1[%c10, %c0_31, %c0_32] : memref<12x2x32xf32, #tpu.memory_space<vmem>>, vector<1x2x32xf32>
    %103 = vector.shape_cast %102 : vector<1x2x32xf32> to vector<2x32xf32>
    %104 = arith.subf %3, %103 : vector<2x32xf32>
    %105 = math.absf %104 : vector<2x32xf32>
    %cst_33 = arith.constant 0.000000e+00 : f32
    %106 = vector.broadcast %cst_33 : f32 to vector<2x32xf32>
    %107 = arith.subf %106, %105 : vector<2x32xf32>
    %108 = math.exp %107 : vector<2x32xf32>
    %109 = arith.addf %101, %108 : vector<2x32xf32>
    %110 = arith.subf %5, %103 : vector<2x32xf32>
    %111 = math.absf %110 : vector<2x32xf32>
    %cst_34 = arith.constant 0.000000e+00 : f32
    %112 = vector.broadcast %cst_34 : f32 to vector<2x32xf32>
    %113 = arith.subf %112, %111 : vector<2x32xf32>
    %114 = math.exp %113 : vector<2x32xf32>
    %115 = arith.addf %109, %114 : vector<2x32xf32>
    %116 = arith.subf %7, %103 : vector<2x32xf32>
    %117 = math.absf %116 : vector<2x32xf32>
    %cst_35 = arith.constant 0.000000e+00 : f32
    %118 = vector.broadcast %cst_35 : f32 to vector<2x32xf32>
    %119 = arith.subf %118, %117 : vector<2x32xf32>
    %120 = math.exp %119 : vector<2x32xf32>
    %121 = arith.addf %115, %120 : vector<2x32xf32>
    %122 = arith.subf %9, %103 : vector<2x32xf32>
    %123 = math.absf %122 : vector<2x32xf32>
    %cst_36 = arith.constant 0.000000e+00 : f32
    %124 = vector.broadcast %cst_36 : f32 to vector<2x32xf32>
    %125 = arith.subf %124, %123 : vector<2x32xf32>
    %126 = math.exp %125 : vector<2x32xf32>
    %127 = arith.addf %121, %126 : vector<2x32xf32>
    %c11 = arith.constant 11 : index
    %c0_37 = arith.constant 0 : index
    %c0_38 = arith.constant 0 : index
    %128 = vector.load %arg1[%c11, %c0_37, %c0_38] : memref<12x2x32xf32, #tpu.memory_space<vmem>>, vector<1x2x32xf32>
    %129 = vector.shape_cast %128 : vector<1x2x32xf32> to vector<2x32xf32>
    %130 = arith.subf %3, %129 : vector<2x32xf32>
    %131 = math.absf %130 : vector<2x32xf32>
    %cst_39 = arith.constant 0.000000e+00 : f32
    %132 = vector.broadcast %cst_39 : f32 to vector<2x32xf32>
    %133 = arith.subf %132, %131 : vector<2x32xf32>
    %134 = math.exp %133 : vector<2x32xf32>
    %135 = arith.addf %127, %134 : vector<2x32xf32>
    %136 = arith.subf %5, %129 : vector<2x32xf32>
    %137 = math.absf %136 : vector<2x32xf32>
    %cst_40 = arith.constant 0.000000e+00 : f32
    %138 = vector.broadcast %cst_40 : f32 to vector<2x32xf32>
    %139 = arith.subf %138, %137 : vector<2x32xf32>
    %140 = math.exp %139 : vector<2x32xf32>
    %141 = arith.addf %135, %140 : vector<2x32xf32>
    %142 = arith.subf %7, %129 : vector<2x32xf32>
    %143 = math.absf %142 : vector<2x32xf32>
    %cst_41 = arith.constant 0.000000e+00 : f32
    %144 = vector.broadcast %cst_41 : f32 to vector<2x32xf32>
    %145 = arith.subf %144, %143 : vector<2x32xf32>
    %146 = math.exp %145 : vector<2x32xf32>
    %147 = arith.addf %141, %146 : vector<2x32xf32>
    %148 = arith.subf %9, %129 : vector<2x32xf32>
    %149 = math.absf %148 : vector<2x32xf32>
    %cst_42 = arith.constant 0.000000e+00 : f32
    %150 = vector.broadcast %cst_42 : f32 to vector<2x32xf32>
    %151 = arith.subf %150, %149 : vector<2x32xf32>
    %152 = math.exp %151 : vector<2x32xf32>
    %153 = arith.addf %147, %152 : vector<2x32xf32>
    %154 = arith.addf %0, %48 : vector<2x32xf32>
    %155 = arith.addf %1, %153 : vector<2x32xf32>
    %156 = vector.shape_cast %154 : vector<2x32xf32> to vector<1x2x32xf32>
    %cst_43 = arith.constant dense<0.000000e+00> : vector<1xf32>
    %157 = vector.multi_reduction <add>, %156, %cst_43 [1, 2] : vector<1x2x32xf32> to vector<1xf32>
    %158 = vector.shape_cast %157 : vector<1xf32> to vector<1x1x1xf32>
    %159 = vector.extract %158[0, 0, 0] : f32 from vector<1x1x1xf32>
    %160 = vector.broadcast %159 : f32 to vector<1x1xf32>
    %cst_44 = arith.constant 3.125000e-03 : f32
    %161 = vector.broadcast %cst_44 : f32 to vector<1x1xf32>
    %162 = arith.mulf %160, %161 : vector<1x1xf32>
    %163 = vector.shape_cast %155 : vector<2x32xf32> to vector<1x2x32xf32>
    %cst_45 = arith.constant dense<0.000000e+00> : vector<1xf32>
    %164 = vector.multi_reduction <add>, %163, %cst_45 [1, 2] : vector<1x2x32xf32> to vector<1xf32>
    %165 = vector.shape_cast %164 : vector<1xf32> to vector<1x1x1xf32>
    %166 = vector.extract %165[0, 0, 0] : f32 from vector<1x1x1xf32>
    %167 = vector.broadcast %166 : f32 to vector<1x1xf32>
    %cst_46 = arith.constant 0.001953125 : f32
    %168 = vector.broadcast %cst_46 : f32 to vector<1x1xf32>
    %169 = arith.mulf %167, %168 : vector<1x1xf32>
    %170 = arith.addf %162, %169 : vector<1x1xf32>
    %171 = vector.shape_cast %170 : vector<1x1xf32> to vector<1x1xf32>
    %172 = vector.broadcast %171 : vector<1x1xf32> to vector<1x128xf32>
    %c0_47 = arith.constant 0 : index
    %c0_48 = arith.constant 0 : index
    %173 = vector.load %arg2[%c0_47, %c0_48] : memref<1x128xf32, #tpu.memory_space<vmem>>, vector<1x128xf32>
    tpu.vector_store %arg2[%c0_47, %c0_48], %172 {strides = array<i32>} : memref<1x128xf32, #tpu.memory_space<vmem>>, vector<1x128xf32>,
    return
  }
  func.func @transform_0(%arg0: i32) -> (i32, i32, i32) {
    %c0_i32 = arith.constant 0 : i32
    %c0_i32_0 = arith.constant 0 : i32
    %c0_i32_1 = arith.constant 0 : i32
    return %c0_i32, %arg0, %c0_i32_0 : i32, i32, i32
  }
  func.func @transform_1(%arg0: i32) -> (i32, i32) {
    %c0_i32 = arith.constant 0 : i32
    %c0_i32_0 = arith.constant 0 : i32
    return %arg0, %c0_i32 : i32, i32
  }
}

</mosaic_0001>

<llo_original>
// kernel: tpu_custom_call.1
$region0: #{tpu_custom_call.1}
  #allocation0 [shape = 'u32[]', space=smem, size = 0x4, offset = 0x4, fixed_abs, tag = 'smem constant byte address 0x4 - core index']
  #allocation1 [shape = 'u32[72,128]{1,0:T(1,128)}', space=vmem, size = 0x9000, scoped, tag = 'internal scratch']
  %s0 = inlined_call_operand.hbm [shape: f32[12,2,32], index: 0, kind: input, shape index: {}]
  %s1 = inlined_call_operand.hbm [shape: f32[1,128], index: 1, kind: output, shape index: {}]
  %s2 = sld [smem:[#allocation0]]
  $region18: #{tpu_custom_call.1} parent=0
    _
  %s4 = ssub.s32 1, %s2
  %s5 = scalar_select 0, %s4, %s2
  $region1: #{tpu_custom_call.1} parent=0
    #allocation2 [shape = 'u8[12288]{0}', space=vmem, size = 0x3000, scoped, tag = 'input window, operand 0, single buffered']
    #allocation3 [shape = 's32[1]{0}', space=sflag, size = 0x4, scoped, tag = 'scoped memory for tpu_custom_call.1']
    #allocation4 [shape = 's32[1]{0}', space=sflag, size = 0x4, scoped, tag = 'scoped memory for tpu_custom_call.1']
    #allocation5 [shape = 'u8[512]{0}', space=vmem, size = 0x400, scoped, tag = 'output window, operand 0, single buffered']
    %6 = vsyncpa [#allocation3], 0
    %7 = vsyncpa [#allocation4], 0
    // Predicated region
    $region2: #{tpu_custom_call.1} parent=1 // pred_check
      _
    $region3: #{tpu_custom_call.1} parent=1 // pred_check_branch
      %9 = sbr.rel (0) target = $region5
    $region4: #{tpu_custom_call.1} parent=1 // pred_region
      %11 = vsyncadd [#allocation3], 0
      %s12 = sshll.u32 %s0, 4
      %s13 = int_to_ptr.hbm [resolvable:$true] %s12
      %s14 = sshll.u32 [#allocation2], 4
      %s15 = int_to_ptr.vmem [resolvable:$true] %s14
      %20 = dma.hbm_to_vmem [thread:$0]  %s13, 384, %s15, [#allocation3], 32, 32, 2
    $region5: #{tpu_custom_call.1} parent=1 // pred_fallthru
      _
    // Predicated region
    $region6: #{tpu_custom_call.1} parent=1 // pred_check
      _
    $region7: #{tpu_custom_call.1} parent=1 // pred_check_branch
      %22 = sbr.rel (0) target = $region9
    $region8: #{tpu_custom_call.1} parent=1 // pred_region
      %24 = dma.done [#allocation3], 384
    $region9: #{tpu_custom_call.1} parent=1 // pred_fallthru
      _
    %v25 = vld [vmem:[#allocation2] sm:$0x3]
    %s26 = scalar_lea.vmem [#allocation2], 2
    %v27 = vld [vmem:[%s26] sm:$0x3]
    %s28 = scalar_lea.vmem [#allocation2], 4
    %v29 = vld [vmem:[%s28] sm:$0x3]
    %s30 = scalar_lea.vmem [#allocation2], 6
    %v31 = vld [vmem:[%s30] sm:$0x3]
    %v32 = vsub.f32 %v25, %v27
    %v33 = vand.u32 2147483647, %v32
    %v34 = vadd.f32 %v33, 0.0
    %v35 = vsub.f32 %v25, %v29
    %v36 = vand.u32 2147483647, %v35
    %v37 = vadd.f32 %v34, %v36
    %v38 = vsub.f32 %v25, %v31
    %v39 = vand.u32 2147483647, %v38
    %v40 = vadd.f32 %v37, %v39
    %v41 = vsub.f32 %v27, %v29
    %v42 = vand.u32 2147483647, %v41
    %v43 = vadd.f32 %v40, %v42
    %v44 = vsub.f32 %v27, %v31
    %v45 = vand.u32 2147483647, %v44
    %v46 = vadd.f32 %v43, %v45
    %v47 = vsub.f32 %v29, %v31
    %v48 = vand.u32 2147483647, %v47
    %v49 = vadd.f32 %v46, %v48
    %s50 = scalar_lea.vmem [#allocation2], 8
    %v51 = vld [vmem:[%s50] sm:$0x3]
    %v52 = vadd.f32 %v25, %v51
    %v53 = vand.u32 2147483647, %v52
    %v54 = vadd.f32 %v49, %v53
    %s55 = scalar_lea.vmem [#allocation2], 10
    %v56 = vld [vmem:[%s55] sm:$0x3]
    %v57 = vadd.f32 %v27, %v56
    %v58 = vand.u32 2147483647, %v57
    %v59 = vadd.f32 %v54, %v58
    %s60 = scalar_lea.vmem [#allocation2], 12
    %v61 = vld [vmem:[%s60] sm:$0x3]
    %v62 = vadd.f32 %v29, %v61
    %v63 = vand.u32 2147483647, %v62
    %v64 = vadd.f32 %v59, %v63
    %s65 = scalar_lea.vmem [#allocation2], 14
    %v66 = vld [vmem:[%s65] sm:$0x3]
    %v67 = vadd.f32 %v31, %v66
    %v68 = vand.u32 2147483647, %v67
    %v69 = vadd.f32 %v64, %v68
    %s70 = scalar_lea.vmem [#allocation2], 16
    %v71 = vld [vmem:[%s70] sm:$0x3]
    %v72 = vsub.f32 %v25, %v71
    %v73 = vand.u32 2147483647, %v72
    %v74 = vsub.f32 0.0, %v73
    %v75 = vmul.f32 %v74, 1.442695
    %v76 = vpow.pop %v75
    %v77 = vadd.f32 %v76, 0.0
    %v78 = vsub.f32 %v27, %v71
    %v79 = vand.u32 2147483647, %v78
    %v80 = vsub.f32 0.0, %v79
    %v81 = vmul.f32 %v80, 1.442695
    %v82 = vpow.pop %v81
    %v83 = vadd.f32 %v77, %v82
    %v84 = vsub.f32 %v29, %v71
    %v85 = vand.u32 2147483647, %v84
    %v86 = vsub.f32 0.0, %v85
    %v87 = vmul.f32 %v86, 1.442695
    %v88 = vpow.pop %v87
    %v89 = vadd.f32 %v83, %v88
    %v90 = vsub.f32 %v31, %v71
    %v91 = vand.u32 2147483647, %v90
    %v92 = vsub.f32 0.0, %v91
    %v93 = vmul.f32 %v92, 1.442695
    %v94 = vpow.pop %v93
    %v95 = vadd.f32 %v89, %v94
    %s96 = scalar_lea.vmem [#allocation2], 18
    %v97 = vld [vmem:[%s96] sm:$0x3]
    %v98 = vsub.f32 %v25, %v97
    %v99 = vand.u32 2147483647, %v98
    %v100 = vsub.f32 0.0, %v99
    %v101 = vmul.f32 %v100, 1.442695
    %v102 = vpow.pop %v101
    %v103 = vadd.f32 %v95, %v102
    %v104 = vsub.f32 %v27, %v97
    %v105 = vand.u32 2147483647, %v104
    %v106 = vsub.f32 0.0, %v105
    %v107 = vmul.f32 %v106, 1.442695
    %v108 = vpow.pop %v107
    %v109 = vadd.f32 %v103, %v108
    %v110 = vsub.f32 %v29, %v97
    %v111 = vand.u32 2147483647, %v110
    %v112 = vsub.f32 0.0, %v111
    %v113 = vmul.f32 %v112, 1.442695
    %v114 = vpow.pop %v113
    %v115 = vadd.f32 %v109, %v114
    %v116 = vsub.f32 %v31, %v97
    %v117 = vand.u32 2147483647, %v116
    %v118 = vsub.f32 0.0, %v117
    %v119 = vmul.f32 %v118, 1.442695
    %v120 = vpow.pop %v119
    %v121 = vadd.f32 %v115, %v120
    %s122 = scalar_lea.vmem [#allocation2], 20
    %v123 = vld [vmem:[%s122] sm:$0x3]
    %v124 = vsub.f32 %v25, %v123
    %v125 = vand.u32 2147483647, %v124
    %v126 = vsub.f32 0.0, %v125
    %v127 = vmul.f32 %v126, 1.442695
    %v128 = vpow.pop %v127
    %v129 = vadd.f32 %v121, %v128
    %v130 = vsub.f32 %v27, %v123
    %v131 = vand.u32 2147483647, %v130
    %v132 = vsub.f32 0.0, %v131
    %v133 = vmul.f32 %v132, 1.442695
    %v134 = vpow.pop %v133
    %v135 = vadd.f32 %v129, %v134
    %v136 = vsub.f32 %v29, %v123
    %v137 = vand.u32 2147483647, %v136
    %v138 = vsub.f32 0.0, %v137
    %v139 = vmul.f32 %v138, 1.442695
    %v140 = vpow.pop %v139
    %v141 = vadd.f32 %v135, %v140
    %v142 = vsub.f32 %v31, %v123
    %v143 = vand.u32 2147483647, %v142
    %v144 = vsub.f32 0.0, %v143
    %v145 = vmul.f32 %v144, 1.442695
    %v146 = vpow.pop %v145
    %v147 = vadd.f32 %v141, %v146
    %s148 = scalar_lea.vmem [#allocation2], 22
    %v149 = vld [vmem:[%s148] sm:$0x3]
    %v150 = vsub.f32 %v25, %v149
    %v151 = vand.u32 2147483647, %v150
    %v152 = vsub.f32 0.0, %v151
    %v153 = vmul.f32 %v152, 1.442695
    %v154 = vpow.pop %v153
    %v155 = vadd.f32 %v147, %v154
    %v156 = vsub.f32 %v27, %v149
    %v157 = vand.u32 2147483647, %v156
    %v158 = vsub.f32 0.0, %v157
    %v159 = vmul.f32 %v158, 1.442695
    %v160 = vpow.pop %v159
    %v161 = vadd.f32 %v155, %v160
    %v162 = vsub.f32 %v29, %v149
    %v163 = vand.u32 2147483647, %v162
    %v164 = vsub.f32 0.0, %v163
    %v165 = vmul.f32 %v164, 1.442695
    %v166 = vpow.pop %v165
    %v167 = vadd.f32 %v161, %v166
    %v168 = vsub.f32 %v31, %v149
    %v169 = vand.u32 2147483647, %v168
    %v170 = vsub.f32 0.0, %v169
    %v171 = vmul.f32 %v170, 1.442695
    %v172 = vpow.pop %v171
    %v173 = vadd.f32 %v167, %v172
    %v174 = vadd.f32 %v69, 0.0
    %v175 = vadd.f32 %v173, 0.0
    %vm176 = vcmask 254976
    %v177 = vsel %vm176, %v174, 0.0
    %178 = vadd.xlane.f32.xlu0 %v177
    %v179 = vpop.xlane.xlu0 %178
    %v180 = vrot.slane %v179, 4
    %v181 = vadd.f32 %v179, %v180
    %v182 = vrot.slane %v181, 2
    %v183 = vadd.f32 %v181, %v182
    %v184 = vrot.slane %v183, 1
    %v185 = vadd.f32 %v183, %v184
    %s186 = vtos %v185
    %v187 = vstv %s186
    %v188 = vmul.f32 %v187, 0.003125
    %v189 = vsel %vm176, %v175, 0.0
    %190 = vadd.xlane.f32.xlu0 %v189
    %v191 = vpop.xlane.xlu0 %190
    %v192 = vrot.slane %v191, 4
    %v193 = vadd.f32 %v191, %v192
    %v194 = vrot.slane %v193, 2
    %v195 = vadd.f32 %v193, %v194
    %v196 = vrot.slane %v195, 1
    %v197 = vadd.f32 %v195, %v196
    %s198 = vtos %v197
    %v199 = vstv %s198
    %v200 = vmul.f32 %v199, 0.001953125
    %v201 = vadd.f32 %v188, %v200
    %202 = vst [vmem:[#allocation5] sm:$0x1] %v201
    // Predicated region
    $region10: #{tpu_custom_call.1} parent=1 // pred_check
      _
    $region11: #{tpu_custom_call.1} parent=1 // pred_check_branch
      %204 = sbr.rel (0) target = $region13
    $region12: #{tpu_custom_call.1} parent=1 // pred_region
      %206 = vsyncadd [#allocation4], 0
      %s208 = sshll.u32 [#allocation5], 4
      %s209 = int_to_ptr.vmem [resolvable:$true] %s208
      %s210 = sshll.u32 %s1, 4
      %s211 = int_to_ptr.hbm [resolvable:$true] %s210
      %213 = dma.vmem_to_hbm [thread:$0]  %s209, 16, %s211, [#allocation4]
    $region13: #{tpu_custom_call.1} parent=1 // pred_fallthru
      _
    // Predicated region
    $region14: #{tpu_custom_call.1} parent=1 // pred_check
      _
    $region15: #{tpu_custom_call.1} parent=1 // pred_check_branch
      %215 = sbr.rel (0) target = $region17
    $region16: #{tpu_custom_call.1} parent=1 // pred_region
      %217 = dma.done [#allocation4], 16
    $region17: #{tpu_custom_call.1} parent=1 // pred_fallthru
      _
    %218 = vsyncpa [#allocation3], 1
    %219 = vsyncpa [#allocation4], 1

</llo_original>
